<compile_context>
chip_gen: v5e
topology: v5e:2x2
jax: 0.10.0
libtpu: 0.0.40
codegen_flags: <defaults>
</compile_context>

<pallas_src>
import functools

import jax
import jax.numpy as jnp
from jax.experimental import pallas as pl
from jax.experimental.pallas import tpu as pltpu

LENGTH_W2V_VECTOR = 256
HIDDEN1 = LENGTH_W2V_VECTOR // 4   # 64
HIDDEN2 = LENGTH_W2V_VECTOR // 8   # 32
NUM_CLASSES = 4


def _mlp_kernel(x_ref, w1_ref, b1_ref, w2_ref, b2_ref, w3_ref, b3_ref, o_ref):
    x = x_ref[...]
    # fc1 + ReLU (MXU matmul, f32 accumulate; bias/activation in f32)
    h1 = jnp.dot(x, w1_ref[...], preferred_element_type=jnp.float32)
    h1 = jnp.maximum(h1 + b1_ref[...].astype(jnp.float32), 0.0)
    # fc2 + ReLU
    h2 = jnp.dot(h1, w2_ref[...], preferred_element_type=jnp.float32)
    h2 = jnp.maximum(h2 + b2_ref[...].astype(jnp.float32), 0.0)
    # fc3 + exact sigmoid
    logits = jnp.dot(h2, w3_ref[...], preferred_element_type=jnp.float32)
    logits = logits + b3_ref[...].astype(jnp.float32)
    sig = 1.0 / (1.0 + jnp.exp(-logits))
    o_ref[...] = sig.astype(o_ref.dtype)


def _round_up(n, m):
    return ((n + m - 1) // m) * m


def _choose_tile(batch, requested):
    """Multiple-of-128 batch tile; aims for >=4 grid steps on large batches."""
    requested = max(128, _round_up(requested, 128))
    # >=4 steps (2 per v7x TensorCore) when the batch is big enough, but never
    # shrink the tile below 512 rows (512 KiB x block).
    target = max(512, _round_up(pl.cdiv(batch, 4), 128))
    return min(requested, target, _round_up(batch, 128))


@functools.partial(jax.jit, static_argnames=("batch_tile",))
def net_forward(x, params, *, batch_tile=2048):
    """x: [B, LENGTH_W2V_VECTOR] (f32 or bf16) -> [B, NUM_CLASSES] float32."""
    w1, b1, w2, b2, w3, b3 = params
    B, D = x.shape
    assert D == LENGTH_W2V_VECTOR

    tile = _choose_tile(B, batch_tile)
    grid = (pl.cdiv(B, tile),)  # partial last block handled by Pallas (no pad)

    const = lambda shape: pl.BlockSpec(shape, lambda i: (0, 0))  # resident block

    weight_bytes = sum(int(p.size) * p.dtype.itemsize for p in params)
    flops = 2 * B * (D * HIDDEN1 + HIDDEN1 * HIDDEN2 + HIDDEN2 * NUM_CLASSES)
    bytes_accessed = (B * D * x.dtype.itemsize            # read x
                      + B * NUM_CLASSES * 4               # write out
                      + weight_bytes)                     # read weights once
    cost = pl.CostEstimate(flops=flops,
                           transcendentals=B * NUM_CLASSES,
                           bytes_accessed=bytes_accessed)

    out = pl.pallas_call(
        _mlp_kernel,
        out_shape=jax.ShapeDtypeStruct((B, NUM_CLASSES), jnp.float32),
        grid_spec=pltpu.PrefetchScalarGridSpec(
            num_scalar_prefetch=0,
            grid=grid,
            in_specs=[
                pl.BlockSpec((tile, D), lambda i: (i, 0)),   # x: streamed over batch
                const((D, HIDDEN1)),                         # w1 (resident in VMEM)
                const((1, HIDDEN1)),                         # b1
                const((HIDDEN1, HIDDEN2)),                   # w2
                const((1, HIDDEN2)),                         # b2
                const((HIDDEN2, NUM_CLASSES)),               # w3
                const((1, NUM_CLASSES)),                     # b3
            ],
            out_specs=pl.BlockSpec((tile, NUM_CLASSES), lambda i: (i, 0)),
        ),
        compiler_params=pltpu.CompilerParams(
            dimension_semantics=("parallel",)),
        cost_estimate=cost,
    )(x, w1, b1, w2, b2, w3, b3)

    return out


def init_params(key, dtype=jnp.float32):
    """Deterministic parameter init (uniform, PyTorch-Linear-like scaling)."""
    ks = jax.random.split(key, 6)

    def linear(kw, kb, fan_in, fan_out):
        bound = 1.0 / jnp.sqrt(fan_in)
        w = jax.random.uniform(kw, (fan_in, fan_out), jnp.float32, -bound, bound)
        b = jax.random.uniform(kb, (1, fan_out), jnp.float32, -bound, bound)
        return w.astype(dtype), b.astype(dtype)

    w1, b1 = linear(ks[0], ks[1], LENGTH_W2V_VECTOR, HIDDEN1)
    w2, b2 = linear(ks[2], ks[3], HIDDEN1, HIDDEN2)
    w3, b3 = linear(ks[4], ks[5], HIDDEN2, NUM_CLASSES)
    return (w1, b1, w2, b2, w3, b3)


def net_forward_ref(x, params):
    w1, b1, w2, b2, w3, b3 = params
    h1 = jnp.maximum(x @ w1 + b1, 0.0)
    h2 = jnp.maximum(h1 @ w2 + b2, 0.0)
    return jax.nn.sigmoid(h2 @ w3 + b3)


if __name__ == "__main__":
    key = jax.random.PRNGKey(0)
    k_x1, k_x2, k_p = jax.random.split(key, 3)

    params = init_params(k_p)

    # Case 1: small batch (single partial block -> masked write-back path).
    B1 = 8
    x1 = jax.random.normal(k_x1, (B1, LENGTH_W2V_VECTOR), jnp.float32)
    out1 = jax.block_until_ready(net_forward(x1, params))
    ref1 = net_forward_ref(x1, params)
    assert out1.shape == (B1, NUM_CLASSES)
    assert jnp.allclose(out1, ref1, atol=1e-5, rtol=1e-5)

    # Case 2: ragged batch (not a multiple of the tile) -> no wrapper pad,
    # Pallas partial last block.
    B2 = 300
    x2 = jax.random.normal(k_x2, (B2, LENGTH_W2V_VECTOR), jnp.float32)
    out2 = jax.block_until_ready(net_forward(x2, params))
    ref2 = net_forward_ref(x2, params)
    assert out2.shape == (B2, NUM_CLASSES)
    assert jnp.allclose(out2, ref2, atol=1e-5, rtol=1e-5)

    # Case 3 (optional fast path): bf16 storage for x/weights halves the
    # dominant HBM read; f32 accumulation in-kernel.  Loose tolerance since
    # this intentionally deviates from exact f32 parity.
    xb = x2.astype(jnp.bfloat16)
    pb = tuple(p.astype(jnp.bfloat16) for p in params)
    out3 = jax.block_until_ready(net_forward(xb, pb))
    ref3 = net_forward_ref(xb.astype(jnp.float32),
                           tuple(p.astype(jnp.float32) for p in pb))
    assert out3.shape == (B2, NUM_CLASSES)
    assert jnp.allclose(out3, ref3, atol=5e-2, rtol=5e-2)

    print("KERNEL_OK")
</pallas_src>

<mosaic_0001>
module attributes {stable_mosaic.version = 11 : i64} {
  func.func @_mlp_kernel(%arg0: i32, %arg1: memref<128x256xf32, #tpu.memory_space<vmem>>, %arg2: memref<256x64xf32, #tpu.memory_space<vmem>>, %arg3: memref<1x64xf32, #tpu.memory_space<vmem>>, %arg4: memref<64x32xf32, #tpu.memory_space<vmem>>, %arg5: memref<1x32xf32, #tpu.memory_space<vmem>>, %arg6: memref<32x4xf32, #tpu.memory_space<vmem>>, %arg7: memref<1x4xf32, #tpu.memory_space<vmem>>, %arg8: memref<128x4xf32, #tpu.memory_space<vmem>>) attributes {dimension_semantics = [#tpu.dimension_semantics<parallel>], iteration_bounds = array<i64: 1>, scalar_prefetch = 0 : i64, scratch_operands = 0 : i64, tpu.core_type = #tpu.core_type<tc>, window_params = [{transform_indices = @transform_0, window_bounds = array<i64: 128, 256>}, {pipeline_mode = #tpu.pipeline_mode<synchronous>, transform_indices = @transform_1, window_bounds = array<i64: 256, 64>}, {pipeline_mode = #tpu.pipeline_mode<synchronous>, transform_indices = @transform_2, window_bounds = array<i64: 1, 64>}, {pipeline_mode = #tpu.pipeline_mode<synchronous>, transform_indices = @transform_3, window_bounds = array<i64: 64, 32>}, {pipeline_mode = #tpu.pipeline_mode<synchronous>, transform_indices = @transform_4, window_bounds = array<i64: 1, 32>}, {pipeline_mode = #tpu.pipeline_mode<synchronous>, transform_indices = @transform_5, window_bounds = array<i64: 32, 4>}, {pipeline_mode = #tpu.pipeline_mode<synchronous>, transform_indices = @transform_6, window_bounds = array<i64: 1, 4>}, {transform_indices = @transform_7, window_bounds = array<i64: 128, 4>}]} {
    %c0 = arith.constant 0 : index
    %c0_0 = arith.constant 0 : index
    %0 = vector.load %arg1[%c0, %c0_0] : memref<128x256xf32, #tpu.memory_space<vmem>>, vector<128x256xf32>
    %c0_1 = arith.constant 0 : index
    %c0_2 = arith.constant 0 : index
    %1 = vector.load %arg2[%c0_1, %c0_2] : memref<256x64xf32, #tpu.memory_space<vmem>>, vector<256x64xf32>
    %cst = arith.constant dense<0.000000e+00> : vector<128x64xf32>
    %2 = tpu.matmul %0, %1, %cst {dimension_numbers = #tpu.dot_dimension_numbers<[1], [0], [0], [1], [0, 0, 1, 1], [], []>} : vector<128x256xf32>, vector<256x64xf32>, vector<128x64xf32> -> vector<128x64xf32>
    %c0_3 = arith.constant 0 : index
    %c0_4 = arith.constant 0 : index
    %3 = vector.load %arg3[%c0_3, %c0_4] : memref<1x64xf32, #tpu.memory_space<vmem>>, vector<1x64xf32>
    %4 = vector.broadcast %3 : vector<1x64xf32> to vector<128x64xf32>
    %5 = arith.addf %2, %4 : vector<128x64xf32>
    %cst_5 = arith.constant 0.000000e+00 : f32
    %6 = vector.broadcast %cst_5 : f32 to vector<128x64xf32>
    %7 = arith.maximumf %5, %6 : vector<128x64xf32>
    %c0_6 = arith.constant 0 : index
    %c0_7 = arith.constant 0 : index
    %8 = vector.load %arg4[%c0_6, %c0_7] : memref<64x32xf32, #tpu.memory_space<vmem>>, vector<64x32xf32>
    %cst_8 = arith.constant dense<0.000000e+00> : vector<128x32xf32>
    %9 = tpu.matmul %7, %8, %cst_8 {dimension_numbers = #tpu.dot_dimension_numbers<[1], [0], [0], [1], [0, 0, 1, 1], [], []>} : vector<128x64xf32>, vector<64x32xf32>, vector<128x32xf32> -> vector<128x32xf32>
    %c0_9 = arith.constant 0 : index
    %c0_10 = arith.constant 0 : index
    %10 = vector.load %arg5[%c0_9, %c0_10] : memref<1x32xf32, #tpu.memory_space<vmem>>, vector<1x32xf32>
    %11 = vector.broadcast %10 : vector<1x32xf32> to vector<128x32xf32>
    %12 = arith.addf %9, %11 : vector<128x32xf32>
    %cst_11 = arith.constant 0.000000e+00 : f32
    %13 = vector.broadcast %cst_11 : f32 to vector<128x32xf32>
    %14 = arith.maximumf %12, %13 : vector<128x32xf32>
    %c0_12 = arith.constant 0 : index
    %c0_13 = arith.constant 0 : index
    %15 = vector.load %arg6[%c0_12, %c0_13] : memref<32x4xf32, #tpu.memory_space<vmem>>, vector<32x4xf32>
    %cst_14 = arith.constant dense<0.000000e+00> : vector<128x4xf32>
    %16 = tpu.matmul %14, %15, %cst_14 {dimension_numbers = #tpu.dot_dimension_numbers<[1], [0], [0], [1], [0, 0, 1, 1], [], []>} : vector<128x32xf32>, vector<32x4xf32>, vector<128x4xf32> -> vector<128x4xf32>
    %c0_15 = arith.constant 0 : index
    %c0_16 = arith.constant 0 : index
    %17 = vector.load %arg7[%c0_15, %c0_16] : memref<1x4xf32, #tpu.memory_space<vmem>>, vector<1x4xf32>
    %18 = vector.broadcast %17 : vector<1x4xf32> to vector<128x4xf32>
    %19 = arith.addf %16, %18 : vector<128x4xf32>
    %cst_17 = arith.constant 0.000000e+00 : f32
    %20 = vector.broadcast %cst_17 : f32 to vector<128x4xf32>
    %21 = arith.subf %20, %19 : vector<128x4xf32>
    %22 = math.exp %21 : vector<128x4xf32>
    %cst_18 = arith.constant 1.000000e+00 : f32
    %23 = vector.broadcast %cst_18 : f32 to vector<128x4xf32>
    %24 = arith.addf %23, %22 : vector<128x4xf32>
    %cst_19 = arith.constant 1.000000e+00 : f32
    %25 = vector.broadcast %cst_19 : f32 to vector<128x4xf32>
    %26 = arith.divf %25, %24 : vector<128x4xf32>
    %c0_20 = arith.constant 0 : index
    %c0_21 = arith.constant 0 : index
    %27 = vector.load %arg8[%c0_20, %c0_21] : memref<128x4xf32, #tpu.memory_space<vmem>>, vector<128x4xf32>
    tpu.vector_store %arg8[%c0_20, %c0_21], %26 {strides = array<i32>} : memref<128x4xf32, #tpu.memory_space<vmem>>, vector<128x4xf32>,
    return
  }
  func.func @transform_0(%arg0: i32) -> (i32, i32) {
    %c0_i32 = arith.constant 0 : i32
    %c0_i32_0 = arith.constant 0 : i32
    return %arg0, %c0_i32 : i32, i32
  }
  func.func @transform_1(%arg0: i32) -> (i32, i32) {
    %c0_i32 = arith.constant 0 : i32
    %c0_i32_0 = arith.constant 0 : i32
    %c0_i32_1 = arith.constant 0 : i32
    return %c0_i32, %c0_i32_0 : i32, i32
  }
  func.func @transform_2(%arg0: i32) -> (i32, i32) {
    %c0_i32 = arith.constant 0 : i32
    %c0_i32_0 = arith.constant 0 : i32
    %c0_i32_1 = arith.constant 0 : i32
    return %c0_i32, %c0_i32_0 : i32, i32
  }
  func.func @transform_3(%arg0: i32) -> (i32, i32) {
    %c0_i32 = arith.constant 0 : i32
    %c0_i32_0 = arith.constant 0 : i32
    %c0_i32_1 = arith.constant 0 : i32
    return %c0_i32, %c0_i32_0 : i32, i32
  }
  func.func @transform_4(%arg0: i32) -> (i32, i32) {
    %c0_i32 = arith.constant 0 : i32
    %c0_i32_0 = arith.constant 0 : i32
    %c0_i32_1 = arith.constant 0 : i32
    return %c0_i32, %c0_i32_0 : i32, i32
  }
  func.func @transform_5(%arg0: i32) -> (i32, i32) {
    %c0_i32 = arith.constant 0 : i32
    %c0_i32_0 = arith.constant 0 : i32
    %c0_i32_1 = arith.constant 0 : i32
    return %c0_i32, %c0_i32_0 : i32, i32
  }
  func.func @transform_6(%arg0: i32) -> (i32, i32) {
    %c0_i32 = arith.constant 0 : i32
    %c0_i32_0 = arith.constant 0 : i32
    %c0_i32_1 = arith.constant 0 : i32
    return %c0_i32, %c0_i32_0 : i32, i32
  }
  func.func @transform_7(%arg0: i32) -> (i32, i32) {
    %c0_i32 = arith.constant 0 : i32
    %c0_i32_0 = arith.constant 0 : i32
    return %arg0, %c0_i32 : i32, i32
  }
}

</mosaic_0001>

<llo_original>
// kernel: net_forward.1
$region0: #{net_forward.1}
  #allocation0 [shape = 'u32[]', space=smem, size = 0x4, offset = 0x4, fixed_abs, tag = 'smem constant byte address 0x4 - core index']
  #allocation1 [shape = 'u32[72,128]{1,0:T(1,128)}', space=vmem, size = 0x9000, scoped, tag = 'internal scratch']
  %s0 = inlined_call_operand.vmem [shape: f32[8,256], index: 0, kind: input, shape index: {}]
  %s1 = inlined_call_operand.vmem [shape: f32[256,64], index: 1, kind: input, shape index: {}]
  %s2 = inlined_call_operand.vmem [shape: f32[1,64], index: 2, kind: input, shape index: {}]
  %s3 = inlined_call_operand.vmem [shape: f32[64,32], index: 3, kind: input, shape index: {}]
  %s4 = inlined_call_operand.vmem [shape: f32[1,32], index: 4, kind: input, shape index: {}]
  %s5 = inlined_call_operand.vmem [shape: f32[32,4], index: 5, kind: input, shape index: {}]
  %s6 = inlined_call_operand.vmem [shape: f32[1,4], index: 6, kind: input, shape index: {}]
  %s7 = inlined_call_operand.vmem [shape: f32[8,4], index: 7, kind: output, shape index: {}]
  %s8 = sld [smem:[#allocation0]]
  $region72: #{net_forward.1} parent=0
    _
  %s10 = ssub.s32 1, %s8
  %s11 = scalar_select 0, %s10, %s8
  $region1: #{net_forward.1} parent=0
    #allocation2 [shape = 'u8[65536]{0}', space=vmem, size = 0x10000, scoped, tag = 'output window, operand 0, single buffered']
    // Predicated region
    $region2: #{net_forward.1} parent=1 // pred_check
      _
    $region3: #{net_forward.1} parent=1 // pred_check_branch
      %13 = sbr.rel (0) target = $region5
    $region4: #{net_forward.1} parent=1 // pred_region
      _
    $region5: #{net_forward.1} parent=1 // pred_fallthru
      _
    // Predicated region
    $region6: #{net_forward.1} parent=1 // pred_check
      _
    $region7: #{net_forward.1} parent=1 // pred_check_branch
      %15 = sbr.rel (0) target = $region9
    $region8: #{net_forward.1} parent=1 // pred_region
      _
    $region9: #{net_forward.1} parent=1 // pred_fallthru
      _
    // Predicated region
    $region10: #{net_forward.1} parent=1 // pred_check
      _
    $region11: #{net_forward.1} parent=1 // pred_check_branch
      %17 = sbr.rel (0) target = $region13
    $region12: #{net_forward.1} parent=1 // pred_region
      _
    $region13: #{net_forward.1} parent=1 // pred_fallthru
      _
    // Predicated region
    $region14: #{net_forward.1} parent=1 // pred_check
      _
    $region15: #{net_forward.1} parent=1 // pred_check_branch
      %19 = sbr.rel (0) target = $region17
    $region16: #{net_forward.1} parent=1 // pred_region
      _
    $region17: #{net_forward.1} parent=1 // pred_fallthru
      _
    // Predicated region
    $region18: #{net_forward.1} parent=1 // pred_check
      _
    $region19: #{net_forward.1} parent=1 // pred_check_branch
      %21 = sbr.rel (0) target = $region21
    $region20: #{net_forward.1} parent=1 // pred_region
      _
    $region21: #{net_forward.1} parent=1 // pred_fallthru
      _
    // Predicated region
    $region22: #{net_forward.1} parent=1 // pred_check
      _
    $region23: #{net_forward.1} parent=1 // pred_check_branch
      %23 = sbr.rel (0) target = $region25
    $region24: #{net_forward.1} parent=1 // pred_region
      _
    $region25: #{net_forward.1} parent=1 // pred_fallthru
      _
    // Predicated region
    $region26: #{net_forward.1} parent=1 // pred_check
      _
    $region27: #{net_forward.1} parent=1 // pred_check_branch
      %25 = sbr.rel (0) target = $region29
    $region28: #{net_forward.1} parent=1 // pred_region
      _
    $region29: #{net_forward.1} parent=1 // pred_fallthru
      _
    %v26 = vld [vmem:[%s0] sm:$0xff]
    %v27 = vld [vmem:[%s0 + $0x8] sm:$0xff]
    %v28 = vld [vmem:[%s0 + $0x10] sm:$0xff]
    %v29 = vld [vmem:[%s0 + $0x18] sm:$0xff]
    %v30 = vld [vmem:[%s0 + $0x20] sm:$0xff]
    %v31 = vld [vmem:[%s0 + $0x28] sm:$0xff]
    %v32 = vld [vmem:[%s0 + $0x30] sm:$0xff]
    %v33 = vld [vmem:[%s0 + $0x38] sm:$0xff]
    %v34 = vld [vmem:[%s0 + $0x40] sm:$0xff]
    %v35 = vld [vmem:[%s0 + $0x48] sm:$0xff]
    %v36 = vld [vmem:[%s0 + $0x50] sm:$0xff]
    %v37 = vld [vmem:[%s0 + $0x58] sm:$0xff]
    %v38 = vld [vmem:[%s0 + $0x60] sm:$0xff]
    %v39 = vld [vmem:[%s0 + $0x68] sm:$0xff]
    %v40 = vld [vmem:[%s0 + $0x70] sm:$0xff]
    %v41 = vld [vmem:[%s0 + $0x78] sm:$0xff]
    %v42 = vld [vmem:[%s0 + $0x80] sm:$0xff]
    %v43 = vld [vmem:[%s0 + $0x88] sm:$0xff]
    %v44 = vld [vmem:[%s0 + $0x90] sm:$0xff]
    %v45 = vld [vmem:[%s0 + $0x98] sm:$0xff]
    %v46 = vld [vmem:[%s0 + $0xa0] sm:$0xff]
    %v47 = vld [vmem:[%s0 + $0xa8] sm:$0xff]
    %v48 = vld [vmem:[%s0 + $0xb0] sm:$0xff]
    %v49 = vld [vmem:[%s0 + $0xb8] sm:$0xff]
    %v50 = vld [vmem:[%s0 + $0xc0] sm:$0xff]
    %v51 = vld [vmem:[%s0 + $0xc8] sm:$0xff]
    %v52 = vld [vmem:[%s0 + $0xd0] sm:$0xff]
    %v53 = vld [vmem:[%s0 + $0xd8] sm:$0xff]
    %v54 = vld [vmem:[%s0 + $0xe0] sm:$0xff]
    %v55 = vld [vmem:[%s0 + $0xe8] sm:$0xff]
    %v56 = vld [vmem:[%s0 + $0xf0] sm:$0xff]
    %v57 = vld [vmem:[%s0 + $0xf8] sm:$0xff]
    %v58 = vld [vmem:[%s1] sm:$0xff]
    %v59 = vld [vmem:[%s1 + $0x8] sm:$0xff]
    %v60 = vld [vmem:[%s1 + $0x10] sm:$0xff]
    %v61 = vld [vmem:[%s1 + $0x18] sm:$0xff]
    %v62 = vld [vmem:[%s1 + $0x20] sm:$0xff]
    %v63 = vld [vmem:[%s1 + $0x28] sm:$0xff]
    %v64 = vld [vmem:[%s1 + $0x30] sm:$0xff]
    %v65 = vld [vmem:[%s1 + $0x38] sm:$0xff]
    %v66 = vld [vmem:[%s1 + $0x40] sm:$0xff]
    %v67 = vld [vmem:[%s1 + $0x48] sm:$0xff]
    %v68 = vld [vmem:[%s1 + $0x50] sm:$0xff]
    %v69 = vld [vmem:[%s1 + $0x58] sm:$0xff]
    %v70 = vld [vmem:[%s1 + $0x60] sm:$0xff]
    %v71 = vld [vmem:[%s1 + $0x68] sm:$0xff]
    %v72 = vld [vmem:[%s1 + $0x70] sm:$0xff]
    %v73 = vld [vmem:[%s1 + $0x78] sm:$0xff]
    %v74 = vld [vmem:[%s1 + $0x80] sm:$0xff]
    %v75 = vld [vmem:[%s1 + $0x88] sm:$0xff]
    %v76 = vld [vmem:[%s1 + $0x90] sm:$0xff]
    %v77 = vld [vmem:[%s1 + $0x98] sm:$0xff]
    %v78 = vld [vmem:[%s1 + $0xa0] sm:$0xff]
    %v79 = vld [vmem:[%s1 + $0xa8] sm:$0xff]
    %v80 = vld [vmem:[%s1 + $0xb0] sm:$0xff]
    %v81 = vld [vmem:[%s1 + $0xb8] sm:$0xff]
    %v82 = vld [vmem:[%s1 + $0xc0] sm:$0xff]
    %v83 = vld [vmem:[%s1 + $0xc8] sm:$0xff]
    %v84 = vld [vmem:[%s1 + $0xd0] sm:$0xff]
    %v85 = vld [vmem:[%s1 + $0xd8] sm:$0xff]
    %v86 = vld [vmem:[%s1 + $0xe0] sm:$0xff]
    %v87 = vld [vmem:[%s1 + $0xe8] sm:$0xff]
    %v88 = vld [vmem:[%s1 + $0xf0] sm:$0xff]
    %v89 = vld [vmem:[%s1 + $0xf8] sm:$0xff]
    %v90 = vld [vmem:[%s2] sm:$0x1]
    %v92 = vperm.slane %v90, 0
    %94 = vmatpush.msra.mxu0 %v73
    %95 = vmatpush.msra.mxu0 %v72
    %96 = vmatpush.msra.mxu0 %v71
    %97 = vmatpush.msra.mxu0 %v70
    %98 = vmatpush.msra.mxu0 %v69
    %99 = vmatpush.msra.mxu0 %v68
    %100 = vmatpush.msra.mxu0 %v67
    %101 = vmatpush.msra.mxu0 %v66
    %102 = vmatpush.msra.mxu0 %v65
    %103 = vmatpush.msra.mxu0 %v64
    %104 = vmatpush.msra.mxu0 %v63
    %105 = vmatpush.msra.mxu0 %v62
    %106 = vmatpush.msra.mxu0 %v61
    %107 = vmatpush.msra.mxu0 %v60
    %108 = vmatpush.msra.mxu0 %v59
    %109 = vmatpush.msra.mxu0 %v58
    %110 = vmatmul.f32.gmra.mxu0 %v26
    %v111 = vpop.f32.mrf.mxu0
    %v112 = vadd.f32 %v92, %v111
    %113 = vmatmul.f32.gmra.mxu0 %v28
    %v114 = vpop.f32.mrf.mxu0
    %v115 = vadd.f32 %v92, %v114
    %116 = vmatmul.f32.gmra.mxu0 %v30
    %v117 = vpop.f32.mrf.mxu0
    %v118 = vadd.f32 %v92, %v117
    %119 = vmatmul.f32.gmra.mxu0 %v32
    %v120 = vpop.f32.mrf.mxu0
    %v121 = vadd.f32 %v92, %v120
    %122 = vmatmul.f32.gmra.mxu0 %v34
    %v123 = vpop.f32.mrf.mxu0
    %v124 = vadd.f32 %v92, %v123
    %125 = vmatmul.f32.gmra.mxu0 %v36
    %v126 = vpop.f32.mrf.mxu0
    %v127 = vadd.f32 %v92, %v126
    %128 = vmatmul.f32.gmra.mxu0 %v38
    %v129 = vpop.f32.mrf.mxu0
    %v130 = vadd.f32 %v92, %v129
    %131 = vmatmul.f32.gmra.mxu0 %v40
    %v132 = vpop.f32.mrf.mxu0
    %v133 = vadd.f32 %v92, %v132
    %134 = vmatmul.f32.gmra.mxu0 %v42
    %v135 = vpop.f32.mrf.mxu0
    %v136 = vadd.f32 %v92, %v135
    %137 = vmatmul.f32.gmra.mxu0 %v44
    %v138 = vpop.f32.mrf.mxu0
    %v139 = vadd.f32 %v92, %v138
    %140 = vmatmul.f32.gmra.mxu0 %v46
    %v141 = vpop.f32.mrf.mxu0
    %v142 = vadd.f32 %v92, %v141
    %143 = vmatmul.f32.gmra.mxu0 %v48
    %v144 = vpop.f32.mrf.mxu0
    %v145 = vadd.f32 %v92, %v144
    %146 = vmatmul.f32.gmra.mxu0 %v50
    %v147 = vpop.f32.mrf.mxu0
    %v148 = vadd.f32 %v92, %v147
    %149 = vmatmul.f32.gmra.mxu0 %v52
    %v150 = vpop.f32.mrf.mxu0
    %v151 = vadd.f32 %v92, %v150
    %152 = vmatmul.f32.gmra.mxu0 %v54
    %v153 = vpop.f32.mrf.mxu0
    %v154 = vadd.f32 %v92, %v153
    %155 = vmatmul.f32.gmra.mxu0 %v56
    %v156 = vpop.f32.mrf.mxu0
    %v157 = vadd.f32 %v92, %v156
    %158 = vdwg.mxu0
    %159 = vmatpush.msra.mxu0 %v89
    %160 = vmatpush.msra.mxu0 %v88
    %161 = vmatpush.msra.mxu0 %v87
    %162 = vmatpush.msra.mxu0 %v86
    %163 = vmatpush.msra.mxu0 %v85
    %164 = vmatpush.msra.mxu0 %v84
    %165 = vmatpush.msra.mxu0 %v83
    %166 = vmatpush.msra.mxu0 %v82
    %167 = vmatpush.msra.mxu0 %v81
    %168 = vmatpush.msra.mxu0 %v80
    %169 = vmatpush.msra.mxu0 %v79
    %170 = vmatpush.msra.mxu0 %v78
    %171 = vmatpush.msra.mxu0 %v77
    %172 = vmatpush.msra.mxu0 %v76
    %173 = vmatpush.msra.mxu0 %v75
    %174 = vmatpush.msra.mxu0 %v74
    %175 = vmatmul.f32.gmra.mxu0 %v27
    %v176 = vpop.f32.mrf.mxu0
    %v177 = vadd.f32 %v112, %v176
    %178 = vmatmul.f32.gmra.mxu0 %v29
    %v179 = vpop.f32.mrf.mxu0
    %v180 = vadd.f32 %v115, %v179
    %181 = vmatmul.f32.gmra.mxu0 %v31
    %v182 = vpop.f32.mrf.mxu0
    %v183 = vadd.f32 %v118, %v182
    %184 = vmatmul.f32.gmra.mxu0 %v33
    %v185 = vpop.f32.mrf.mxu0
    %v186 = vadd.f32 %v121, %v185
    %187 = vmatmul.f32.gmra.mxu0 %v35
    %v188 = vpop.f32.mrf.mxu0
    %v189 = vadd.f32 %v124, %v188
    %190 = vmatmul.f32.gmra.mxu0 %v37
    %v191 = vpop.f32.mrf.mxu0
    %v192 = vadd.f32 %v127, %v191
    %193 = vmatmul.f32.gmra.mxu0 %v39
    %v194 = vpop.f32.mrf.mxu0
    %v195 = vadd.f32 %v130, %v194
    %196 = vmatmul.f32.gmra.mxu0 %v41
    %v197 = vpop.f32.mrf.mxu0
    %v198 = vadd.f32 %v133, %v197
    %199 = vmatmul.f32.gmra.mxu0 %v43
    %v200 = vpop.f32.mrf.mxu0
    %v201 = vadd.f32 %v136, %v200
    %202 = vmatmul.f32.gmra.mxu0 %v45
    %v203 = vpop.f32.mrf.mxu0
    %v204 = vadd.f32 %v139, %v203
    %205 = vmatmul.f32.gmra.mxu0 %v47
    %v206 = vpop.f32.mrf.mxu0
    %v207 = vadd.f32 %v142, %v206
    %208 = vmatmul.f32.gmra.mxu0 %v49
    %v209 = vpop.f32.mrf.mxu0
    %v210 = vadd.f32 %v145, %v209
    %211 = vmatmul.f32.gmra.mxu0 %v51
    %v212 = vpop.f32.mrf.mxu0
    %v213 = vadd.f32 %v148, %v212
    %214 = vmatmul.f32.gmra.mxu0 %v53
    %v215 = vpop.f32.mrf.mxu0
    %v216 = vadd.f32 %v151, %v215
    %217 = vmatmul.f32.gmra.mxu0 %v55
    %v218 = vpop.f32.mrf.mxu0
    %v219 = vadd.f32 %v154, %v218
    %220 = vmatmul.f32.gmra.mxu0 %v57
    %v221 = vpop.f32.mrf.mxu0
    %v222 = vadd.f32 %v157, %v221
    %223 = vdwg.mxu0
    %v224 = vmax.f32 %v177, 0.0
    %v225 = vmax.f32 %v180, 0.0
    %v226 = vmax.f32 %v183, 0.0
    %v227 = vmax.f32 %v186, 0.0
    %v228 = vmax.f32 %v189, 0.0
    %v229 = vmax.f32 %v192, 0.0
    %v230 = vmax.f32 %v195, 0.0
    %v231 = vmax.f32 %v198, 0.0
    %v232 = vmax.f32 %v201, 0.0
    %v233 = vmax.f32 %v204, 0.0
    %v234 = vmax.f32 %v207, 0.0
    %v235 = vmax.f32 %v210, 0.0
    %v236 = vmax.f32 %v213, 0.0
    %v237 = vmax.f32 %v216, 0.0
    %v238 = vmax.f32 %v219, 0.0
    %v239 = vmax.f32 %v222, 0.0
    %v240 = vld [vmem:[%s3] sm:$0xff]
    %v241 = vld [vmem:[%s3 + $0x8] sm:$0xff]
    %v242 = vld [vmem:[%s3 + $0x10] sm:$0xff]
    %v243 = vld [vmem:[%s3 + $0x18] sm:$0xff]
    %v244 = vld [vmem:[%s3 + $0x20] sm:$0xff]
    %v245 = vld [vmem:[%s3 + $0x28] sm:$0xff]
    %v246 = vld [vmem:[%s3 + $0x30] sm:$0xff]
    %v247 = vld [vmem:[%s3 + $0x38] sm:$0xff]
    %v248 = vld [vmem:[%s4] sm:$0x1]
    %v250 = vperm.slane %v248, 0
    %vm252 = vcmask 523264
    %v254 = vsel %vm252, %v224, 0
    %v257 = vsel %vm252, %v225, 0
    %v260 = vsel %vm252, %v226, 0
    %v263 = vsel %vm252, %v227, 0
    %v266 = vsel %vm252, %v228, 0
    %v269 = vsel %vm252, %v229, 0
    %v272 = vsel %vm252, %v230, 0
    %v275 = vsel %vm252, %v231, 0
    %v278 = vsel %vm252, %v232, 0
    %v281 = vsel %vm252, %v233, 0
    %v284 = vsel %vm252, %v234, 0
    %v287 = vsel %vm252, %v235, 0
    %v290 = vsel %vm252, %v236, 0
    %v293 = vsel %vm252, %v237, 0
    %v296 = vsel %vm252, %v238, 0
    %v299 = vsel %vm252, %v239, 0
    %301 = vmatpush.msra.mxu0 0.0
    %302 = vmatpush.msra.mxu0 0.0
    %303 = vmatpush.msra.mxu0 0.0
    %304 = vmatpush.msra.mxu0 0.0
    %305 = vmatpush.msra.mxu0 0.0
    %306 = vmatpush.msra.mxu0 0.0
    %307 = vmatpush.msra.mxu0 0.0
    %308 = vmatpush.msra.mxu0 0.0
    %309 = vmatpush.msra.mxu0 %v247
    %310 = vmatpush.msra.mxu0 %v246
    %311 = vmatpush.msra.mxu0 %v245
    %312 = vmatpush.msra.mxu0 %v244
    %313 = vmatpush.msra.mxu0 %v243
    %314 = vmatpush.msra.mxu0 %v242
    %315 = vmatpush.msra.mxu0 %v241
    %316 = vmatpush.msra.mxu0 %v240
    %317 = vmatmul.f32.gmra.mxu0 %v254
    %v318 = vpop.f32.mrf.mxu0
    %v319 = vadd.f32 %v250, %v318
    %320 = vmatmul.f32.gmra.mxu0 %v257
    %v321 = vpop.f32.mrf.mxu0
    %v322 = vadd.f32 %v250, %v321
    %323 = vmatmul.f32.gmra.mxu0 %v260
    %v324 = vpop.f32.mrf.mxu0
    %v325 = vadd.f32 %v250, %v324
    %326 = vmatmul.f32.gmra.mxu0 %v263
    %v327 = vpop.f32.mrf.mxu0
    %v328 = vadd.f32 %v250, %v327
    %329 = vmatmul.f32.gmra.mxu0 %v266
    %v330 = vpop.f32.mrf.mxu0
    %v331 = vadd.f32 %v250, %v330
    %332 = vmatmul.f32.gmra.mxu0 %v269
    %v333 = vpop.f32.mrf.mxu0
    %v334 = vadd.f32 %v250, %v333
    %335 = vmatmul.f32.gmra.mxu0 %v272
    %v336 = vpop.f32.mrf.mxu0
    %v337 = vadd.f32 %v250, %v336
    %338 = vmatmul.f32.gmra.mxu0 %v275
    %v339 = vpop.f32.mrf.mxu0
    %v340 = vadd.f32 %v250, %v339
    %341 = vmatmul.f32.gmra.mxu0 %v278
    %v342 = vpop.f32.mrf.mxu0
    %v343 = vadd.f32 %v250, %v342
    %344 = vmatmul.f32.gmra.mxu0 %v281
    %v345 = vpop.f32.mrf.mxu0
    %v346 = vadd.f32 %v250, %v345
    %347 = vmatmul.f32.gmra.mxu0 %v284
    %v348 = vpop.f32.mrf.mxu0
    %v349 = vadd.f32 %v250, %v348
    %350 = vmatmul.f32.gmra.mxu0 %v287
    %v351 = vpop.f32.mrf.mxu0
    %v352 = vadd.f32 %v250, %v351
    %353 = vmatmul.f32.gmra.mxu0 %v290
    %v354 = vpop.f32.mrf.mxu0
    %v355 = vadd.f32 %v250, %v354
    %356 = vmatmul.f32.gmra.mxu0 %v293
    %v357 = vpop.f32.mrf.mxu0
    %v358 = vadd.f32 %v250, %v357
    %359 = vmatmul.f32.gmra.mxu0 %v296
    %v360 = vpop.f32.mrf.mxu0
    %v361 = vadd.f32 %v250, %v360
    %362 = vmatmul.f32.gmra.mxu0 %v299
    %v363 = vpop.f32.mrf.mxu0
    %v364 = vadd.f32 %v250, %v363
    %365 = vdwg.mxu0
    %v366 = vmax.f32 %v319, 0.0
    %v367 = vmax.f32 %v322, 0.0
    %v368 = vmax.f32 %v325, 0.0
    %v369 = vmax.f32 %v328, 0.0
    %v370 = vmax.f32 %v331, 0.0
    %v371 = vmax.f32 %v334, 0.0
    %v372 = vmax.f32 %v337, 0.0
    %v373 = vmax.f32 %v340, 0.0
    %v374 = vmax.f32 %v343, 0.0
    %v375 = vmax.f32 %v346, 0.0
    %v376 = vmax.f32 %v349, 0.0
    %v377 = vmax.f32 %v352, 0.0
    %v378 = vmax.f32 %v355, 0.0
    %v379 = vmax.f32 %v358, 0.0
    %v380 = vmax.f32 %v361, 0.0
    %v381 = vmax.f32 %v364, 0.0
    %v382 = vld [vmem:[%s5] sm:$0xff]
    %v383 = vld [vmem:[%s5 + $0x8] sm:$0xff]
    %v384 = vld [vmem:[%s5 + $0x10] sm:$0xff]
    %v385 = vld [vmem:[%s5 + $0x18] sm:$0xff]
    %v386 = vld [vmem:[%s6] sm:$0x1]
    %v388 = vperm.slane %v386, 0
    %vm390 = vcmask 261120
    %v392 = vsel %vm390, %v366, 0
    %v395 = vsel %vm390, %v367, 0
    %v398 = vsel %vm390, %v368, 0
    %v401 = vsel %vm390, %v369, 0
    %v404 = vsel %vm390, %v370, 0
    %v407 = vsel %vm390, %v371, 0
    %v410 = vsel %vm390, %v372, 0
    %v413 = vsel %vm390, %v373, 0
    %v416 = vsel %vm390, %v374, 0
    %v419 = vsel %vm390, %v375, 0
    %v422 = vsel %vm390, %v376, 0
    %v425 = vsel %vm390, %v377, 0
    %v428 = vsel %vm390, %v378, 0
    %v431 = vsel %vm390, %v379, 0
    %v434 = vsel %vm390, %v380, 0
    %v437 = vsel %vm390, %v381, 0
    %439 = vmatpush.msra.mxu0 0.0
    %440 = vmatpush.msra.mxu0 0.0
    %441 = vmatpush.msra.mxu0 0.0
    %442 = vmatpush.msra.mxu0 0.0
    %443 = vmatpush.msra.mxu0 0.0
    %444 = vmatpush.msra.mxu0 0.0
    %445 = vmatpush.msra.mxu0 0.0
    %446 = vmatpush.msra.mxu0 0.0
    %447 = vmatpush.msra.mxu0 0.0
    %448 = vmatpush.msra.mxu0 0.0
    %449 = vmatpush.msra.mxu0 0.0
    %450 = vmatpush.msra.mxu0 0.0
    %451 = vmatpush.msra.mxu0 %v385
    %452 = vmatpush.msra.mxu0 %v384
    %453 = vmatpush.msra.mxu0 %v383
    %454 = vmatpush.msra.mxu0 %v382
    %455 = vmatmul.f32.gmra.mxu0 %v392
    %v456 = vpop.f32.mrf.mxu0
    %v457 = vadd.f32 %v388, %v456
    %458 = vmatmul.f32.gmra.mxu0 %v395
    %v459 = vpop.f32.mrf.mxu0
    %v460 = vadd.f32 %v388, %v459
    %461 = vmatmul.f32.gmra.mxu0 %v398
    %v462 = vpop.f32.mrf.mxu0
    %v463 = vadd.f32 %v388, %v462
    %464 = vmatmul.f32.gmra.mxu0 %v401
    %v465 = vpop.f32.mrf.mxu0
    %v466 = vadd.f32 %v388, %v465
    %467 = vmatmul.f32.gmra.mxu0 %v404
    %v468 = vpop.f32.mrf.mxu0
    %v469 = vadd.f32 %v388, %v468
    %470 = vmatmul.f32.gmra.mxu0 %v407
    %v471 = vpop.f32.mrf.mxu0
    %v472 = vadd.f32 %v388, %v471
    %473 = vmatmul.f32.gmra.mxu0 %v410
    %v474 = vpop.f32.mrf.mxu0
    %v475 = vadd.f32 %v388, %v474
    %476 = vmatmul.f32.gmra.mxu0 %v413
    %v477 = vpop.f32.mrf.mxu0
    %v478 = vadd.f32 %v388, %v477
    %479 = vmatmul.f32.gmra.mxu0 %v416
    %v480 = vpop.f32.mrf.mxu0
    %v481 = vadd.f32 %v388, %v480
    %482 = vmatmul.f32.gmra.mxu0 %v419
    %v483 = vpop.f32.mrf.mxu0
    %v484 = vadd.f32 %v388, %v483
    %485 = vmatmul.f32.gmra.mxu0 %v422
    %v486 = vpop.f32.mrf.mxu0
    %v487 = vadd.f32 %v388, %v486
    %488 = vmatmul.f32.gmra.mxu0 %v425
    %v489 = vpop.f32.mrf.mxu0
    %v490 = vadd.f32 %v388, %v489
    %491 = vmatmul.f32.gmra.mxu0 %v428
    %v492 = vpop.f32.mrf.mxu0
    %v493 = vadd.f32 %v388, %v492
    %494 = vmatmul.f32.gmra.mxu0 %v431
    %v495 = vpop.f32.mrf.mxu0
    %v496 = vadd.f32 %v388, %v495
    %497 = vmatmul.f32.gmra.mxu0 %v434
    %v498 = vpop.f32.mrf.mxu0
    %v499 = vadd.f32 %v388, %v498
    %500 = vmatmul.f32.gmra.mxu0 %v437
    %v501 = vpop.f32.mrf.mxu0
    %v502 = vadd.f32 %v388, %v501
    %503 = vdwg.mxu0
    %v504 = vsub.f32 0.0, %v457
    %v505 = vsub.f32 0.0, %v460
    %v506 = vsub.f32 0.0, %v463
    %v507 = vsub.f32 0.0, %v466
    %v508 = vsub.f32 0.0, %v469
    %v509 = vsub.f32 0.0, %v472
    %v510 = vsub.f32 0.0, %v475
    %v511 = vsub.f32 0.0, %v478
    %v512 = vsub.f32 0.0, %v481
    %v513 = vsub.f32 0.0, %v484
    %v514 = vsub.f32 0.0, %v487
    %v515 = vsub.f32 0.0, %v490
    %v516 = vsub.f32 0.0, %v493
    %v517 = vsub.f32 0.0, %v496
    %v518 = vsub.f32 0.0, %v499
    %v519 = vsub.f32 0.0, %v502
    %v520 = vmul.f32 %v504, 1.442695
    %v521 = vpow.pop %v520
    %v522 = vmul.f32 %v505, 1.442695
    %v523 = vpow.pop %v522
    %v524 = vmul.f32 %v506, 1.442695
    %v525 = vpow.pop %v524
    %v526 = vmul.f32 %v507, 1.442695
    %v527 = vpow.pop %v526
    %v528 = vmul.f32 %v508, 1.442695
    %v529 = vpow.pop %v528
    %v530 = vmul.f32 %v509, 1.442695
    %v531 = vpow.pop %v530
    %v532 = vmul.f32 %v510, 1.442695
    %v533 = vpow.pop %v532
    %v534 = vmul.f32 %v511, 1.442695
    %v535 = vpow.pop %v534
    %v536 = vmul.f32 %v512, 1.442695
    %v537 = vpow.pop %v536
    %v538 = vmul.f32 %v513, 1.442695
    %v539 = vpow.pop %v538
    %v540 = vmul.f32 %v514, 1.442695
    %v541 = vpow.pop %v540
    %v542 = vmul.f32 %v515, 1.442695
    %v543 = vpow.pop %v542
    %v544 = vmul.f32 %v516, 1.442695
    %v545 = vpow.pop %v544
    %v546 = vmul.f32 %v517, 1.442695
    %v547 = vpow.pop %v546
    %v548 = vmul.f32 %v518, 1.442695
    %v549 = vpow.pop %v548
    %v550 = vmul.f32 %v519, 1.442695
    %v551 = vpow.pop %v550
    %v552 = vadd.f32 %v521, 1.0
    %v553 = vadd.f32 %v523, 1.0
    %v554 = vadd.f32 %v525, 1.0
    %v555 = vadd.f32 %v527, 1.0
    %v556 = vadd.f32 %v529, 1.0
    %v557 = vadd.f32 %v531, 1.0
    %v558 = vadd.f32 %v533, 1.0
    %v559 = vadd.f32 %v535, 1.0
    %v560 = vadd.f32 %v537, 1.0
    %v561 = vadd.f32 %v539, 1.0
    %v562 = vadd.f32 %v541, 1.0
    %v563 = vadd.f32 %v543, 1.0
    %v564 = vadd.f32 %v545, 1.0
    %v565 = vadd.f32 %v547, 1.0
    %v566 = vadd.f32 %v549, 1.0
    %v567 = vadd.f32 %v551, 1.0
    %v568 = vrcp.pop %v552
    %v569 = vmul.f32 %v552, %v568
    %v570 = vsub.f32 1.0, %v569
    %v571 = vmul.f32 %v568, %v570
    %v572 = vadd.f32 %v568, %v571
    %vm573 = vweird.f32 %v552
    %vm574 = vweird.f32 %v568
    %vm575 = vmor %vm573, %vm574
    %v576 = vsel %vm575, %v568, %v572
    %v577 = vand.u32 2147483647, %v552
    %vm578 = vcmp.eq.f32.partialorder %v577, 8.507059e+37
    %v579 = vand.u32 %v552, 2147483648
    %v580 = vor.u32 1.1754944e-38, %v579
    %v581 = vsel %vm578, %v580, %v576
    %v582 = vmul.f32 1.0, %v581
    %v583 = vrcp.pop %v553
    %v584 = vmul.f32 %v553, %v583
    %v585 = vsub.f32 1.0, %v584
    %v586 = vmul.f32 %v583, %v585
    %v587 = vadd.f32 %v583, %v586
    %vm588 = vweird.f32 %v553
    %vm589 = vweird.f32 %v583
    %vm590 = vmor %vm588, %vm589
    %v591 = vsel %vm590, %v583, %v587
    %v592 = vand.u32 2147483647, %v553
    %vm593 = vcmp.eq.f32.partialorder %v592, 8.507059e+37
    %v594 = vand.u32 %v553, 2147483648
    %v595 = vor.u32 1.1754944e-38, %v594
    %v596 = vsel %vm593, %v595, %v591
    %v597 = vmul.f32 1.0, %v596
    %v598 = vrcp.pop %v554
    %v599 = vmul.f32 %v554, %v598
    %v600 = vsub.f32 1.0, %v599
    %v601 = vmul.f32 %v598, %v600
    %v602 = vadd.f32 %v598, %v601
    %vm603 = vweird.f32 %v554
    %vm604 = vweird.f32 %v598
    %vm605 = vmor %vm603, %vm604
    %v606 = vsel %vm605, %v598, %v602
    %v607 = vand.u32 2147483647, %v554
    %vm608 = vcmp.eq.f32.partialorder %v607, 8.507059e+37
    %v609 = vand.u32 %v554, 2147483648
    %v610 = vor.u32 1.1754944e-38, %v609
    %v611 = vsel %vm608, %v610, %v606
    %v612 = vmul.f32 1.0, %v611
    %v613 = vrcp.pop %v555
    %v614 = vmul.f32 %v555, %v613
    %v615 = vsub.f32 1.0, %v614
    %v616 = vmul.f32 %v613, %v615
    %v617 = vadd.f32 %v613, %v616
    %vm618 = vweird.f32 %v555
    %vm619 = vweird.f32 %v613
    %vm620 = vmor %vm618, %vm619
    %v621 = vsel %vm620, %v613, %v617
    %v622 = vand.u32 2147483647, %v555
    %vm623 = vcmp.eq.f32.partialorder %v622, 8.507059e+37
    %v624 = vand.u32 %v555, 2147483648
    %v625 = vor.u32 1.1754944e-38, %v624
    %v626 = vsel %vm623, %v625, %v621
    %v627 = vmul.f32 1.0, %v626
    %v628 = vrcp.pop %v556
    %v629 = vmul.f32 %v556, %v628
    %v630 = vsub.f32 1.0, %v629
    %v631 = vmul.f32 %v628, %v630
    %v632 = vadd.f32 %v628, %v631
    %vm633 = vweird.f32 %v556
    %vm634 = vweird.f32 %v628
    %vm635 = vmor %vm633, %vm634
    %v636 = vsel %vm635, %v628, %v632
    %v637 = vand.u32 2147483647, %v556
    %vm638 = vcmp.eq.f32.partialorder %v637, 8.507059e+37
    %v639 = vand.u32 %v556, 2147483648
    %v640 = vor.u32 1.1754944e-38, %v639
    %v641 = vsel %vm638, %v640, %v636
    %v642 = vmul.f32 1.0, %v641
    %v643 = vrcp.pop %v557
    %v644 = vmul.f32 %v557, %v643
    %v645 = vsub.f32 1.0, %v644
    %v646 = vmul.f32 %v643, %v645
    %v647 = vadd.f32 %v643, %v646
    %vm648 = vweird.f32 %v557
    %vm649 = vweird.f32 %v643
    %vm650 = vmor %vm648, %vm649
    %v651 = vsel %vm650, %v643, %v647
    %v652 = vand.u32 2147483647, %v557
    %vm653 = vcmp.eq.f32.partialorder %v652, 8.507059e+37
    %v654 = vand.u32 %v557, 2147483648
    %v655 = vor.u32 1.1754944e-38, %v654
    %v656 = vsel %vm653, %v655, %v651
    %v657 = vmul.f32 1.0, %v656
    %v658 = vrcp.pop %v558
    %v659 = vmul.f32 %v558, %v658
    %v660 = vsub.f32 1.0, %v659
    %v661 = vmul.f32 %v658, %v660
    %v662 = vadd.f32 %v658, %v661
    %vm663 = vweird.f32 %v558
    %vm664 = vweird.f32 %v658
    %vm665 = vmor %vm663, %vm664
    %v666 = vsel %vm665, %v658, %v662
    %v667 = vand.u32 2147483647, %v558
    %vm668 = vcmp.eq.f32.partialorder %v667, 8.507059e+37
    %v669 = vand.u32 %v558, 2147483648
    %v670 = vor.u32 1.1754944e-38, %v669
    %v671 = vsel %vm668, %v670, %v666
    %v672 = vmul.f32 1.0, %v671
    %v673 = vrcp.pop %v559
    %v674 = vmul.f32 %v559, %v673
    %v675 = vsub.f32 1.0, %v674
    %v676 = vmul.f32 %v673, %v675
    %v677 = vadd.f32 %v673, %v676
    %vm678 = vweird.f32 %v559
    %vm679 = vweird.f32 %v673
    %vm680 = vmor %vm678, %vm679
    %v681 = vsel %vm680, %v673, %v677
    %v682 = vand.u32 2147483647, %v559
    %vm683 = vcmp.eq.f32.partialorder %v682, 8.507059e+37
    %v684 = vand.u32 %v559, 2147483648
    %v685 = vor.u32 1.1754944e-38, %v684
    %v686 = vsel %vm683, %v685, %v681
    %v687 = vmul.f32 1.0, %v686
    %v688 = vrcp.pop %v560
    %v689 = vmul.f32 %v560, %v688
    %v690 = vsub.f32 1.0, %v689
    %v691 = vmul.f32 %v688, %v690
    %v692 = vadd.f32 %v688, %v691
    %vm693 = vweird.f32 %v560
    %vm694 = vweird.f32 %v688
    %vm695 = vmor %vm693, %vm694
    %v696 = vsel %vm695, %v688, %v692
    %v697 = vand.u32 2147483647, %v560
    %vm698 = vcmp.eq.f32.partialorder %v697, 8.507059e+37
    %v699 = vand.u32 %v560, 2147483648
    %v700 = vor.u32 1.1754944e-38, %v699
    %v701 = vsel %vm698, %v700, %v696
    %v702 = vmul.f32 1.0, %v701
    %v703 = vrcp.pop %v561
    %v704 = vmul.f32 %v561, %v703
    %v705 = vsub.f32 1.0, %v704
    %v706 = vmul.f32 %v703, %v705
    %v707 = vadd.f32 %v703, %v706
    %vm708 = vweird.f32 %v561
    %vm709 = vweird.f32 %v703
    %vm710 = vmor %vm708, %vm709
    %v711 = vsel %vm710, %v703, %v707
    %v712 = vand.u32 2147483647, %v561
    %vm713 = vcmp.eq.f32.partialorder %v712, 8.507059e+37
    %v714 = vand.u32 %v561, 2147483648
    %v715 = vor.u32 1.1754944e-38, %v714
    %v716 = vsel %vm713, %v715, %v711
    %v717 = vmul.f32 1.0, %v716
    %v718 = vrcp.pop %v562
    %v719 = vmul.f32 %v562, %v718
    %v720 = vsub.f32 1.0, %v719
    %v721 = vmul.f32 %v718, %v720
    %v722 = vadd.f32 %v718, %v721
    %vm723 = vweird.f32 %v562
    %vm724 = vweird.f32 %v718
    %vm725 = vmor %vm723, %vm724
    %v726 = vsel %vm725, %v718, %v722
    %v727 = vand.u32 2147483647, %v562
    %vm728 = vcmp.eq.f32.partialorder %v727, 8.507059e+37
    %v729 = vand.u32 %v562, 2147483648
    %v730 = vor.u32 1.1754944e-38, %v729
    %v731 = vsel %vm728, %v730, %v726
    %v732 = vmul.f32 1.0, %v731
    %v733 = vrcp.pop %v563
    %v734 = vmul.f32 %v563, %v733
    %v735 = vsub.f32 1.0, %v734
    %v736 = vmul.f32 %v733, %v735
    %v737 = vadd.f32 %v733, %v736
    %vm738 = vweird.f32 %v563
    %vm739 = vweird.f32 %v733
    %vm740 = vmor %vm738, %vm739
    %v741 = vsel %vm740, %v733, %v737
    %v742 = vand.u32 2147483647, %v563
    %vm743 = vcmp.eq.f32.partialorder %v742, 8.507059e+37
    %v744 = vand.u32 %v563, 2147483648
    %v745 = vor.u32 1.1754944e-38, %v744
    %v746 = vsel %vm743, %v745, %v741
    %v747 = vmul.f32 1.0, %v746
    %v748 = vrcp.pop %v564
    %v749 = vmul.f32 %v564, %v748
    %v750 = vsub.f32 1.0, %v749
    %v751 = vmul.f32 %v748, %v750
    %v752 = vadd.f32 %v748, %v751
    %vm753 = vweird.f32 %v564
    %vm754 = vweird.f32 %v748
    %vm755 = vmor %vm753, %vm754
    %v756 = vsel %vm755, %v748, %v752
    %v757 = vand.u32 2147483647, %v564
    %vm758 = vcmp.eq.f32.partialorder %v757, 8.507059e+37
    %v759 = vand.u32 %v564, 2147483648
    %v760 = vor.u32 1.1754944e-38, %v759
    %v761 = vsel %vm758, %v760, %v756
    %v762 = vmul.f32 1.0, %v761
    %v763 = vrcp.pop %v565
    %v764 = vmul.f32 %v565, %v763
    %v765 = vsub.f32 1.0, %v764
    %v766 = vmul.f32 %v763, %v765
    %v767 = vadd.f32 %v763, %v766
    %vm768 = vweird.f32 %v565
    %vm769 = vweird.f32 %v763
    %vm770 = vmor %vm768, %vm769
    %v771 = vsel %vm770, %v763, %v767
    %v772 = vand.u32 2147483647, %v565
    %vm773 = vcmp.eq.f32.partialorder %v772, 8.507059e+37
    %v774 = vand.u32 %v565, 2147483648
    %v775 = vor.u32 1.1754944e-38, %v774
    %v776 = vsel %vm773, %v775, %v771
    %v777 = vmul.f32 1.0, %v776
    %v778 = vrcp.pop %v566
    %v779 = vmul.f32 %v566, %v778
    %v780 = vsub.f32 1.0, %v779
    %v781 = vmul.f32 %v778, %v780
    %v782 = vadd.f32 %v778, %v781
    %vm783 = vweird.f32 %v566
    %vm784 = vweird.f32 %v778
    %vm785 = vmor %vm783, %vm784
    %v786 = vsel %vm785, %v778, %v782
    %v787 = vand.u32 2147483647, %v566
    %vm788 = vcmp.eq.f32.partialorder %v787, 8.507059e+37
    %v789 = vand.u32 %v566, 2147483648
    %v790 = vor.u32 1.1754944e-38, %v789
    %v791 = vsel %vm788, %v790, %v786
    %v792 = vmul.f32 1.0, %v791
    %v793 = vrcp.pop %v567
    %v794 = vmul.f32 %v567, %v793
    %v795 = vsub.f32 1.0, %v794
    %v796 = vmul.f32 %v793, %v795
    %v797 = vadd.f32 %v793, %v796
    %vm798 = vweird.f32 %v567
    %vm799 = vweird.f32 %v793
    %vm800 = vmor %vm798, %vm799
    %v801 = vsel %vm800, %v793, %v797
    %v802 = vand.u32 2147483647, %v567
    %vm803 = vcmp.eq.f32.partialorder %v802, 8.507059e+37
    %v804 = vand.u32 %v567, 2147483648
    %v805 = vor.u32 1.1754944e-38, %v804
    %v806 = vsel %vm803, %v805, %v801
    %v807 = vmul.f32 1.0, %v806
    %vm808 = vcmask 31744
    %809 = vst.msk [vmem:[#allocation2] sm:$0xff] %vm808, %v582
    %810 = vst.msk [vmem:[#allocation2 + $0x8] sm:$0xff] %vm808, %v597
    %811 = vst.msk [vmem:[#allocation2 + $0x10] sm:$0xff] %vm808, %v612
    %812 = vst.msk [vmem:[#allocation2 + $0x18] sm:$0xff] %vm808, %v627
    %813 = vst.msk [vmem:[#allocation2 + $0x20] sm:$0xff] %vm808, %v642
    %814 = vst.msk [vmem:[#allocation2 + $0x28] sm:$0xff] %vm808, %v657
    %815 = vst.msk [vmem:[#allocation2 + $0x30] sm:$0xff] %vm808, %v672
    %816 = vst.msk [vmem:[#allocation2 + $0x38] sm:$0xff] %vm808, %v687
    %817 = vst.msk [vmem:[#allocation2 + $0x40] sm:$0xff] %vm808, %v702
    %818 = vst.msk [vmem:[#allocation2 + $0x48] sm:$0xff] %vm808, %v717
    %819 = vst.msk [vmem:[#allocation2 + $0x50] sm:$0xff] %vm808, %v732
    %820 = vst.msk [vmem:[#allocation2 + $0x58] sm:$0xff] %vm808, %v747
    %821 = vst.msk [vmem:[#allocation2 + $0x60] sm:$0xff] %vm808, %v762
    %822 = vst.msk [vmem:[#allocation2 + $0x68] sm:$0xff] %vm808, %v777
    %823 = vst.msk [vmem:[#allocation2 + $0x70] sm:$0xff] %vm808, %v792
    %824 = vst.msk [vmem:[#allocation2 + $0x78] sm:$0xff] %vm808, %v807
    // Predicated region
    $region30: #{net_forward.1} parent=1 // pred_check
      _
    $region31: #{net_forward.1} parent=1 // pred_check_branch
      %826 = sbr.rel (0) target = $region33
    $region32: #{net_forward.1} parent=1 // pred_region
      // Predicated region
      $region34: #{net_forward.1} parent=32 // pred_check
        _
      $region35: #{net_forward.1} parent=32 // pred_check_branch
        %828 = sbr.rel (0) target = $region37
      $region36: #{net_forward.1} parent=32 // pred_region
        // Predicated region
        $region38: #{net_forward.1} parent=36 // pred_check
          _
        $region39: #{net_forward.1} parent=36 // pred_check_branch
          %830 = sbr.rel (0) target = $region41
        $region40: #{net_forward.1} parent=36 // pred_region
          // Predicated region
          $region53: #{net_forward.1} parent=40 // pred_check
            _
          $region54: #{net_forward.1} parent=40 // pred_check_branch
            %846 = sbr.rel (0) target = $region56
          $region55: #{net_forward.1} parent=40 // pred_region
            loop: start=0, step=1, limit=1
            $region57: #{net_forward.1} parent=55 // loop_pre_header
              _
            $region58: #{net_forward.1} parent=55 // loop_header
              %s848 = sphi 0, %s852
              %p849 = scmp.ge.s32.totalorder %s848, 1
              %s853 = sphi [#allocation2], [#allocation2]
              %s854 = sphi %s7, %s7
            $region59: #{net_forward.1} parent=55 // loop_header_branch
              %851 = sbr.rel (%p849) target = $region63
            $region60: #{net_forward.1} parent=55 // loop_body
              %v855 = vld [vmem:[%s853] sm:$0xff]
              %856 = vst [vmem:[%s854] sm:$0xff] %v855
            $region61: #{net_forward.1} parent=55 // loop_footer
              %s852 = sadd.s32 1, %s848
            $region62: #{net_forward.1} parent=55 // loop_footer_branch
              %847 = sbr.rel target = $region58
            $region63: #{net_forward.1} parent=55 // loop_exit
              _
          $region56: #{net_forward.1} parent=40 // pred_fallthru
            _
          // Predicated region
          $region64: #{net_forward.1} parent=40 // pred_check
            _
          $region65: #{net_forward.1} parent=40 // pred_check_branch
            %858 = sbr.rel target = $region67
          $region66: #{net_forward.1} parent=40 // pred_region
            _
          $region67: #{net_forward.1} parent=40 // pred_fallthru
            _
        $region41: #{net_forward.1} parent=36 // pred_fallthru
          _
        // Predicated region
        $region42: #{net_forward.1} parent=36 // pred_check
          _
        $region43: #{net_forward.1} parent=36 // pred_check_branch
          %832 = sbr.rel target = $region45
        $region44: #{net_forward.1} parent=36 // pred_region
          %s834 = ssub.s32 256, 1
          loop: start=0, step=1, limit=1
          $region46: #{net_forward.1} parent=44 // loop_pre_header
            _
          $region47: #{net_forward.1} parent=44 // loop_header
            %s836 = sphi 0, %s840
            %p837 = scmp.ge.s32.totalorder %s836, 1
            %s841 = sphi [#allocation2], [#allocation2]
            %s842 = sphi %s7, %s7
          $region48: #{net_forward.1} parent=44 // loop_header_branch
            %839 = sbr.rel (%p837) target = $region52
          $region49: #{net_forward.1} parent=44 // loop_body
            %v843 = vld [vmem:[%s841] sm:%s834]
            %844 = vst [vmem:[%s842] sm:%s834] %v843
          $region50: #{net_forward.1} parent=44 // loop_footer
            %s840 = sadd.s32 1, %s836
          $region51: #{net_forward.1} parent=44 // loop_footer_branch
            %835 = sbr.rel target = $region47
          $region52: #{net_forward.1} parent=44 // loop_exit
            _
        $region45: #{net_forward.1} parent=36 // pred_fallthru
          _
      $region37: #{net_forward.1} parent=32 // pred_fallthru
        _
      %859 = vnop
    $region33: #{net_forward.1} parent=1 // pred_fallthru
      _
    // Predicated region
    $region68: #{net_forward.1} parent=1 // pred_check
      _
    $region69: #{net_forward.1} parent=1 // pred_check_branch
      %861 = sbr.rel (0) target = $region71
    $region70: #{net_forward.1} parent=1 // pred_region
      _
    $region71: #{net_forward.1} parent=1 // pred_fallthru
      _

</llo_original>
